<compile_context>
chip_gen: v7x
topology: tpu7x:2x2x1
jax: 0.10.0
libtpu: 0.0.40
codegen_flags: <defaults>
</compile_context>

<pallas_src>
import functools

import jax
import jax.numpy as jnp
from jax.experimental import pallas as pl
from jax.experimental.pallas import tpu as pltpu


def _round_up(x, m):
    return ((x + m - 1) // m) * m


def _rnn_fc_kernel(x_ref, wih_ref, whh_ref, b_ref, wfc_ref, bfc_ref,
                   out_ref, logit_ref, zx_ref, *, unroll):
    # x_ref: (T, tb, E) time-major embedded inputs for this batch tile.
    T, tb, E = x_ref.shape
    H = whh_ref.shape[1]

    # Hoisted input projection: a single (T*tb, E)@(E, H) MXU matmul with the
    # bias folded in once -> no per-step x@W_ih and no per-step bias broadcast
    # on the serial recurrence path.
    x2 = x_ref[...].reshape(T * tb, E)
    zx = jnp.dot(x2, wih_ref[...], preferred_element_type=jnp.float32)
    zx_ref[...] = (zx + b_ref[...]).reshape(T, tb, H)

    w_hh = whh_ref[...]                       # resident, already in compute dtype

    h0 = jnp.zeros((tb, H), jnp.float32)

    def step(t, h):
        # Only the (tb,H)@(H,H) matmul + tanh remain on the serial chain.
        z = zx_ref[t] + jnp.dot(h.astype(w_hh.dtype), w_hh,
                                preferred_element_type=jnp.float32)
        return jnp.tanh(z)                    # elementwise stays f32 (v5e-safe)

    h_last = jax.lax.fori_loop(0, T, step, h0, unroll=unroll)

    out_ref[...] = h_last.astype(out_ref.dtype)
    logit_ref[...] = (jnp.dot(h_last.astype(wfc_ref.dtype), wfc_ref[...],
                              preferred_element_type=jnp.float32)
                      + bfc_ref[...]).astype(logit_ref.dtype)


def _choose_tb(B_pad, per_row_bytes, fixed_bytes, budget_bytes):
    """Largest batch tile that divides B_pad, is a multiple of 8, fits the
    VMEM budget, and (when possible) leaves >= 2 grid steps for megacore."""
    cands = [t for t in range(8, min(B_pad, 512) + 1, 8) if B_pad % t == 0]
    fits = [t for t in cands if fixed_bytes + t * per_row_bytes <= budget_bytes]
    if not fits:
        return 8
    best = max(fits)
    if best == B_pad and (B_pad // 2) in fits:    # prefer grid >= 2 (v7x 2-TC)
        best = B_pad // 2
    return best


def rnn_pretrained_vecs_4(x_tok, emb_mat, w_ih, w_hh, b, w_fc, b_fc, *,
                          tb=None, use_bf16_matmul=False,
                          vmem_budget_bytes=40 << 20, vmem_limit_bytes=None):
    """x_tok: [B, T] int32 token ids. emb_mat: [V, E]. Weights pre-transposed:
    w_ih [E, H], w_hh [H, H], b [1, H] (= b_ih + b_hh), w_fc [H, C], b_fc [1, C].
    Returns (last_hidden [B, H], logits [B, C])."""
    B, T = x_tok.shape
    _, E = emb_mat.shape
    H = w_hh.shape[0]
    C = w_fc.shape[1]

    # Lane-dense padding: pad feature dims to multiples of 128; padded weight
    # columns/rows are zero so results match after slicing.
    E_pad, H_pad, C_pad = (_round_up(d, 128) for d in (E, H, C))
    B_pad = _round_up(B, 8)

    emb_p = jnp.pad(emb_mat, ((0, 0), (0, E_pad - E)))
    w_ih_p = jnp.pad(w_ih, ((0, E_pad - E), (0, H_pad - H)))
    w_hh_p = jnp.pad(w_hh, ((0, H_pad - H), (0, H_pad - H)))
    b_p = jnp.pad(b, ((0, 0), (0, H_pad - H)))
    w_fc_p = jnp.pad(w_fc, ((0, H_pad - H), (0, C_pad - C)))
    b_fc_p = jnp.pad(b_fc, ((0, 0), (0, C_pad - C)))

    tok = x_tok if B_pad == B else jnp.pad(x_tok, ((0, B_pad - B), (0, 0)))

    # Embedding gather straight into time-major layout [T, B_pad, E_pad]
    # (no separate transpose pass over the biggest tensor).
    # TODO(synk): data-dependent gather stays in XLA, not in-kernel.
    x_tm = jnp.take(emb_p, tok.T, axis=0)

    if use_bf16_matmul:
        # Cast streamed input + resident weights in the wrapper; biases and
        # the hidden-state carry / accumulation stay f32.
        x_tm = x_tm.astype(jnp.bfloat16)
        w_ih_p = w_ih_p.astype(jnp.bfloat16)
        w_hh_p = w_hh_p.astype(jnp.bfloat16)
        w_fc_p = w_fc_p.astype(jnp.bfloat16)

    itemsz = 2 if use_bf16_matmul else 4
    # VMEM per batch row: double-buffered x tile + Zx scratch + output tiles.
    per_row = 2 * T * E_pad * itemsz + T * H_pad * 4 + 2 * (H_pad + C_pad) * 4
    fixed = (2 * (E_pad * H_pad + H_pad * H_pad + H_pad * C_pad) * itemsz
             + 2 * (H_pad + C_pad) * 4)

    if tb is None:
        tb = _choose_tb(B_pad, per_row, fixed, vmem_budget_bytes)
    assert B_pad % tb == 0 and tb % 8 == 0, "batch tile must be mult of 8 dividing padded batch"

    footprint = fixed + tb * per_row
    if vmem_limit_bytes is None and footprint > (24 << 20):
        vmem_limit_bytes = min(int(footprint * 1.25) + (4 << 20), 100 << 20)

    unroll = min(T, 8)   # bounded unroll: LLO visibility without code blowup
    kernel = functools.partial(_rnn_fc_kernel, unroll=unroll)

    grid = (B_pad // tb,)
    out_last, logits = pl.pallas_call(
        kernel,
        out_shape=(jax.ShapeDtypeStruct((B_pad, H_pad), jnp.float32),
                   jax.ShapeDtypeStruct((B_pad, C_pad), jnp.float32)),
        grid_spec=pltpu.PrefetchScalarGridSpec(
            num_scalar_prefetch=0,
            grid=grid,
            in_specs=[
                pl.BlockSpec((T, tb, E_pad), lambda i: (0, i, 0)),   # x tile
                pl.BlockSpec((E_pad, H_pad), lambda i: (0, 0)),      # w_ih (resident)
                pl.BlockSpec((H_pad, H_pad), lambda i: (0, 0)),      # w_hh (resident)
                pl.BlockSpec((1, H_pad), lambda i: (0, 0)),          # b
                pl.BlockSpec((H_pad, C_pad), lambda i: (0, 0)),      # w_fc (resident)
                pl.BlockSpec((1, C_pad), lambda i: (0, 0)),          # b_fc
            ],
            out_specs=[
                pl.BlockSpec((tb, H_pad), lambda i: (i, 0)),         # last hidden
                pl.BlockSpec((tb, C_pad), lambda i: (i, 0)),         # fc1 logits
            ],
            scratch_shapes=[pltpu.VMEM((T, tb, H_pad), jnp.float32)],  # Zx
        ),
        compiler_params=pltpu.CompilerParams(
            dimension_semantics=("parallel",),
            vmem_limit_bytes=vmem_limit_bytes),
    )(x_tm, w_ih_p, w_hh_p, b_p, w_fc_p, b_fc_p)
    return out_last[:B, :H], logits[:B, :C]


def init_params(key, embed_dim, hidden_size, num_class):
    """Deterministic init mirroring PyTorch RNN/Linear shapes, stored transposed
    as [in, out]; RNN biases combined into one [1, H]."""
    ks = jax.random.split(key, 6)
    bound_rnn = 1.0 / jnp.sqrt(hidden_size)

    w_ih = jax.random.uniform(ks[0], (embed_dim, hidden_size), jnp.float32,
                              -bound_rnn, bound_rnn)
    w_hh = jax.random.uniform(ks[1], (hidden_size, hidden_size), jnp.float32,
                              -bound_rnn, bound_rnn)
    b_ih = jax.random.uniform(ks[2], (1, hidden_size), jnp.float32,
                              -bound_rnn, bound_rnn)
    b_hh = jax.random.uniform(ks[3], (1, hidden_size), jnp.float32,
                              -bound_rnn, bound_rnn)
    b = b_ih + b_hh

    bound_fc = 1.0 / jnp.sqrt(hidden_size)
    w_fc = jax.random.uniform(ks[4], (hidden_size, num_class), jnp.float32,
                              -bound_fc, bound_fc)
    b_fc = jax.random.uniform(ks[5], (1, num_class), jnp.float32,
                              -bound_fc, bound_fc)
    return w_ih, w_hh, b, w_fc, b_fc


if __name__ == "__main__":
    vocab_size, embed_dim, hidden_size, num_class = 16, 32, 32, 4
    batch, seq_len = 8, 8

    key = jax.random.PRNGKey(0)
    k_emb, k_tok, k_par = jax.random.split(key, 3)

    emb_mat = jax.random.normal(k_emb, (vocab_size, embed_dim), jnp.float32)
    x_tok = jax.random.randint(k_tok, (batch, seq_len), 0, vocab_size, jnp.int32)
    w_ih, w_hh, b, w_fc, b_fc = init_params(k_par, embed_dim, hidden_size, num_class)

    # f32 path (tight correctness check).
    out_last, logits = rnn_pretrained_vecs_4(x_tok, emb_mat, w_ih, w_hh, b, w_fc, b_fc)
    out_last = jax.block_until_ready(out_last)
    logits = jax.block_until_ready(logits)

    # Plain-JAX reference of the PyTorch forward.
    x_emb = jnp.take(emb_mat, x_tok, axis=0)            # [B, T, E]
    h = jnp.zeros((batch, hidden_size), jnp.float32)
    for t in range(seq_len):
        h = jnp.tanh(x_emb[:, t, :] @ w_ih + h @ w_hh + b)
    ref_out = h
    ref_logits = h @ w_fc + b_fc

    assert out_last.shape == (batch, hidden_size)
    assert logits.shape == (batch, num_class)
    assert jnp.allclose(out_last, ref_out, atol=1e-4, rtol=1e-4)
    assert jnp.allclose(logits, ref_logits, atol=1e-4, rtol=1e-4)

    # bf16-MXU path (wrapper-side cast of x + weights, f32 accumulation/carry).
    out_bf, log_bf = rnn_pretrained_vecs_4(x_tok, emb_mat, w_ih, w_hh, b, w_fc, b_fc,
                                           use_bf16_matmul=True)
    out_bf = jax.block_until_ready(out_bf)
    log_bf = jax.block_until_ready(log_bf)
    assert jnp.allclose(out_bf, ref_out, atol=5e-2, rtol=5e-2)
    assert jnp.allclose(log_bf, ref_logits, atol=5e-2, rtol=5e-2)

    print("KERNEL_OK")
</pallas_src>

<mosaic_0001>
module attributes {stable_mosaic.version = 11 : i64} {
  func.func @_rnn_fc_kernel(%arg0: i32, %arg1: memref<8x8x128xf32, #tpu.memory_space<vmem>>, %arg2: memref<128x128xf32, #tpu.memory_space<vmem>>, %arg3: memref<128x128xf32, #tpu.memory_space<vmem>>, %arg4: memref<1x128xf32, #tpu.memory_space<vmem>>, %arg5: memref<128x128xf32, #tpu.memory_space<vmem>>, %arg6: memref<1x128xf32, #tpu.memory_space<vmem>>, %arg7: memref<8x128xf32, #tpu.memory_space<vmem>>, %arg8: memref<8x128xf32, #tpu.memory_space<vmem>>, %arg9: memref<8x8x128xf32, #tpu.memory_space<vmem>>) attributes {dimension_semantics = [#tpu.dimension_semantics<parallel>], iteration_bounds = array<i64: 1>, scalar_prefetch = 0 : i64, scratch_operands = 1 : i64, tpu.core_type = #tpu.core_type<tc>, window_params = [{transform_indices = @transform_0, window_bounds = array<i64: 8, 8, 128>}, {pipeline_mode = #tpu.pipeline_mode<synchronous>, transform_indices = @transform_1, window_bounds = array<i64: 128, 128>}, {pipeline_mode = #tpu.pipeline_mode<synchronous>, transform_indices = @transform_2, window_bounds = array<i64: 128, 128>}, {pipeline_mode = #tpu.pipeline_mode<synchronous>, transform_indices = @transform_3, window_bounds = array<i64: 1, 128>}, {pipeline_mode = #tpu.pipeline_mode<synchronous>, transform_indices = @transform_4, window_bounds = array<i64: 128, 128>}, {pipeline_mode = #tpu.pipeline_mode<synchronous>, transform_indices = @transform_5, window_bounds = array<i64: 1, 128>}, {transform_indices = @transform_6, window_bounds = array<i64: 8, 128>}, {transform_indices = @transform_7, window_bounds = array<i64: 8, 128>}]} {
    %c0 = arith.constant 0 : index
    %c0_0 = arith.constant 0 : index
    %c0_1 = arith.constant 0 : index
    %0 = vector.load %arg1[%c0, %c0_0, %c0_1] : memref<8x8x128xf32, #tpu.memory_space<vmem>>, vector<8x8x128xf32>
    %1 = vector.shape_cast %0 : vector<8x8x128xf32> to vector<64x128xf32>
    %c0_2 = arith.constant 0 : index
    %c0_3 = arith.constant 0 : index
    %2 = vector.load %arg2[%c0_2, %c0_3] : memref<128x128xf32, #tpu.memory_space<vmem>>, vector<128x128xf32>
    %cst = arith.constant dense<0.000000e+00> : vector<64x128xf32>
    %3 = tpu.matmul %1, %2, %cst {dimension_numbers = #tpu.dot_dimension_numbers<[1], [0], [0], [1], [0, 0, 1, 1], [], []>} : vector<64x128xf32>, vector<128x128xf32>, vector<64x128xf32> -> vector<64x128xf32>
    %c0_4 = arith.constant 0 : index
    %c0_5 = arith.constant 0 : index
    %4 = vector.load %arg4[%c0_4, %c0_5] : memref<1x128xf32, #tpu.memory_space<vmem>>, vector<1x128xf32>
    %5 = vector.broadcast %4 : vector<1x128xf32> to vector<64x128xf32>
    %6 = arith.addf %3, %5 : vector<64x128xf32>
    %7 = vector.shape_cast %6 : vector<64x128xf32> to vector<8x8x128xf32>
    %c0_6 = arith.constant 0 : index
    %c0_7 = arith.constant 0 : index
    %c0_8 = arith.constant 0 : index
    %8 = vector.load %arg9[%c0_6, %c0_7, %c0_8] : memref<8x8x128xf32, #tpu.memory_space<vmem>>, vector<8x8x128xf32>
    tpu.vector_store %arg9[%c0_6, %c0_7, %c0_8], %7 {strides = array<i32>} : memref<8x8x128xf32, #tpu.memory_space<vmem>>, vector<8x8x128xf32>,
    %c0_9 = arith.constant 0 : index
    %c0_10 = arith.constant 0 : index
    %9 = vector.load %arg3[%c0_9, %c0_10] : memref<128x128xf32, #tpu.memory_space<vmem>>, vector<128x128xf32>
    %cst_11 = arith.constant 0.000000e+00 : f32
    %10 = vector.broadcast %cst_11 : f32 to vector<8x128xf32>
    %c0_i32 = arith.constant 0 : i32
    %11 = arith.index_cast %c0_i32 : i32 to index
    %c0_12 = arith.constant 0 : index
    %c0_13 = arith.constant 0 : index
    %12 = vector.load %arg9[%11, %c0_12, %c0_13] : memref<8x8x128xf32, #tpu.memory_space<vmem>>, vector<1x8x128xf32>
    %13 = vector.shape_cast %12 : vector<1x8x128xf32> to vector<8x128xf32>
    %cst_14 = arith.constant dense<0.000000e+00> : vector<8x128xf32>
    %14 = tpu.matmul %10, %9, %cst_14 {dimension_numbers = #tpu.dot_dimension_numbers<[1], [0], [0], [1], [0, 0, 1, 1], [], []>} : vector<8x128xf32>, vector<128x128xf32>, vector<8x128xf32> -> vector<8x128xf32>
    %15 = arith.addf %13, %14 : vector<8x128xf32>
    %16 = math.tanh %15 : vector<8x128xf32>
    %c1_i32 = arith.constant 1 : i32
    %17 = arith.index_cast %c1_i32 : i32 to index
    %c0_15 = arith.constant 0 : index
    %c0_16 = arith.constant 0 : index
    %18 = vector.load %arg9[%17, %c0_15, %c0_16] : memref<8x8x128xf32, #tpu.memory_space<vmem>>, vector<1x8x128xf32>
    %19 = vector.shape_cast %18 : vector<1x8x128xf32> to vector<8x128xf32>
    %cst_17 = arith.constant dense<0.000000e+00> : vector<8x128xf32>
    %20 = tpu.matmul %16, %9, %cst_17 {dimension_numbers = #tpu.dot_dimension_numbers<[1], [0], [0], [1], [0, 0, 1, 1], [], []>} : vector<8x128xf32>, vector<128x128xf32>, vector<8x128xf32> -> vector<8x128xf32>
    %21 = arith.addf %19, %20 : vector<8x128xf32>
    %22 = math.tanh %21 : vector<8x128xf32>
    %c2_i32 = arith.constant 2 : i32
    %23 = arith.index_cast %c2_i32 : i32 to index
    %c0_18 = arith.constant 0 : index
    %c0_19 = arith.constant 0 : index
    %24 = vector.load %arg9[%23, %c0_18, %c0_19] : memref<8x8x128xf32, #tpu.memory_space<vmem>>, vector<1x8x128xf32>
    %25 = vector.shape_cast %24 : vector<1x8x128xf32> to vector<8x128xf32>
    %cst_20 = arith.constant dense<0.000000e+00> : vector<8x128xf32>
    %26 = tpu.matmul %22, %9, %cst_20 {dimension_numbers = #tpu.dot_dimension_numbers<[1], [0], [0], [1], [0, 0, 1, 1], [], []>} : vector<8x128xf32>, vector<128x128xf32>, vector<8x128xf32> -> vector<8x128xf32>
    %27 = arith.addf %25, %26 : vector<8x128xf32>
    %28 = math.tanh %27 : vector<8x128xf32>
    %c3_i32 = arith.constant 3 : i32
    %29 = arith.index_cast %c3_i32 : i32 to index
    %c0_21 = arith.constant 0 : index
    %c0_22 = arith.constant 0 : index
    %30 = vector.load %arg9[%29, %c0_21, %c0_22] : memref<8x8x128xf32, #tpu.memory_space<vmem>>, vector<1x8x128xf32>
    %31 = vector.shape_cast %30 : vector<1x8x128xf32> to vector<8x128xf32>
    %cst_23 = arith.constant dense<0.000000e+00> : vector<8x128xf32>
    %32 = tpu.matmul %28, %9, %cst_23 {dimension_numbers = #tpu.dot_dimension_numbers<[1], [0], [0], [1], [0, 0, 1, 1], [], []>} : vector<8x128xf32>, vector<128x128xf32>, vector<8x128xf32> -> vector<8x128xf32>
    %33 = arith.addf %31, %32 : vector<8x128xf32>
    %34 = math.tanh %33 : vector<8x128xf32>
    %c4_i32 = arith.constant 4 : i32
    %35 = arith.index_cast %c4_i32 : i32 to index
    %c0_24 = arith.constant 0 : index
    %c0_25 = arith.constant 0 : index
    %36 = vector.load %arg9[%35, %c0_24, %c0_25] : memref<8x8x128xf32, #tpu.memory_space<vmem>>, vector<1x8x128xf32>
    %37 = vector.shape_cast %36 : vector<1x8x128xf32> to vector<8x128xf32>
    %cst_26 = arith.constant dense<0.000000e+00> : vector<8x128xf32>
    %38 = tpu.matmul %34, %9, %cst_26 {dimension_numbers = #tpu.dot_dimension_numbers<[1], [0], [0], [1], [0, 0, 1, 1], [], []>} : vector<8x128xf32>, vector<128x128xf32>, vector<8x128xf32> -> vector<8x128xf32>
    %39 = arith.addf %37, %38 : vector<8x128xf32>
    %40 = math.tanh %39 : vector<8x128xf32>
    %c5_i32 = arith.constant 5 : i32
    %41 = arith.index_cast %c5_i32 : i32 to index
    %c0_27 = arith.constant 0 : index
    %c0_28 = arith.constant 0 : index
    %42 = vector.load %arg9[%41, %c0_27, %c0_28] : memref<8x8x128xf32, #tpu.memory_space<vmem>>, vector<1x8x128xf32>
    %43 = vector.shape_cast %42 : vector<1x8x128xf32> to vector<8x128xf32>
    %cst_29 = arith.constant dense<0.000000e+00> : vector<8x128xf32>
    %44 = tpu.matmul %40, %9, %cst_29 {dimension_numbers = #tpu.dot_dimension_numbers<[1], [0], [0], [1], [0, 0, 1, 1], [], []>} : vector<8x128xf32>, vector<128x128xf32>, vector<8x128xf32> -> vector<8x128xf32>
    %45 = arith.addf %43, %44 : vector<8x128xf32>
    %46 = math.tanh %45 : vector<8x128xf32>
    %c6_i32 = arith.constant 6 : i32
    %47 = arith.index_cast %c6_i32 : i32 to index
    %c0_30 = arith.constant 0 : index
    %c0_31 = arith.constant 0 : index
    %48 = vector.load %arg9[%47, %c0_30, %c0_31] : memref<8x8x128xf32, #tpu.memory_space<vmem>>, vector<1x8x128xf32>
    %49 = vector.shape_cast %48 : vector<1x8x128xf32> to vector<8x128xf32>
    %cst_32 = arith.constant dense<0.000000e+00> : vector<8x128xf32>
    %50 = tpu.matmul %46, %9, %cst_32 {dimension_numbers = #tpu.dot_dimension_numbers<[1], [0], [0], [1], [0, 0, 1, 1], [], []>} : vector<8x128xf32>, vector<128x128xf32>, vector<8x128xf32> -> vector<8x128xf32>
    %51 = arith.addf %49, %50 : vector<8x128xf32>
    %52 = math.tanh %51 : vector<8x128xf32>
    %c7_i32 = arith.constant 7 : i32
    %53 = arith.index_cast %c7_i32 : i32 to index
    %c0_33 = arith.constant 0 : index
    %c0_34 = arith.constant 0 : index
    %54 = vector.load %arg9[%53, %c0_33, %c0_34] : memref<8x8x128xf32, #tpu.memory_space<vmem>>, vector<1x8x128xf32>
    %55 = vector.shape_cast %54 : vector<1x8x128xf32> to vector<8x128xf32>
    %cst_35 = arith.constant dense<0.000000e+00> : vector<8x128xf32>
    %56 = tpu.matmul %52, %9, %cst_35 {dimension_numbers = #tpu.dot_dimension_numbers<[1], [0], [0], [1], [0, 0, 1, 1], [], []>} : vector<8x128xf32>, vector<128x128xf32>, vector<8x128xf32> -> vector<8x128xf32>
    %57 = arith.addf %55, %56 : vector<8x128xf32>
    %58 = math.tanh %57 : vector<8x128xf32>
    %c8_i32 = arith.constant 8 : i32
    %c0_36 = arith.constant 0 : index
    %c0_37 = arith.constant 0 : index
    %59 = vector.load %arg7[%c0_36, %c0_37] : memref<8x128xf32, #tpu.memory_space<vmem>>, vector<8x128xf32>
    tpu.vector_store %arg7[%c0_36, %c0_37], %58 {strides = array<i32>} : memref<8x128xf32, #tpu.memory_space<vmem>>, vector<8x128xf32>,
    %c0_38 = arith.constant 0 : index
    %c0_39 = arith.constant 0 : index
    %60 = vector.load %arg5[%c0_38, %c0_39] : memref<128x128xf32, #tpu.memory_space<vmem>>, vector<128x128xf32>
    %cst_40 = arith.constant dense<0.000000e+00> : vector<8x128xf32>
    %61 = tpu.matmul %58, %60, %cst_40 {dimension_numbers = #tpu.dot_dimension_numbers<[1], [0], [0], [1], [0, 0, 1, 1], [], []>} : vector<8x128xf32>, vector<128x128xf32>, vector<8x128xf32> -> vector<8x128xf32>
    %c0_41 = arith.constant 0 : index
    %c0_42 = arith.constant 0 : index
    %62 = vector.load %arg6[%c0_41, %c0_42] : memref<1x128xf32, #tpu.memory_space<vmem>>, vector<1x128xf32>
    %63 = vector.broadcast %62 : vector<1x128xf32> to vector<8x128xf32>
    %64 = arith.addf %61, %63 : vector<8x128xf32>
    %c0_43 = arith.constant 0 : index
    %c0_44 = arith.constant 0 : index
    %65 = vector.load %arg8[%c0_43, %c0_44] : memref<8x128xf32, #tpu.memory_space<vmem>>, vector<8x128xf32>
    tpu.vector_store %arg8[%c0_43, %c0_44], %64 {strides = array<i32>} : memref<8x128xf32, #tpu.memory_space<vmem>>, vector<8x128xf32>,
    return
  }
  func.func @transform_0(%arg0: i32) -> (i32, i32, i32) {
    %c0_i32 = arith.constant 0 : i32
    %c0_i32_0 = arith.constant 0 : i32
    %c0_i32_1 = arith.constant 0 : i32
    return %c0_i32, %arg0, %c0_i32_0 : i32, i32, i32
  }
  func.func @transform_1(%arg0: i32) -> (i32, i32) {
    %c0_i32 = arith.constant 0 : i32
    %c0_i32_0 = arith.constant 0 : i32
    %c0_i32_1 = arith.constant 0 : i32
    return %c0_i32, %c0_i32_0 : i32, i32
  }
  func.func @transform_2(%arg0: i32) -> (i32, i32) {
    %c0_i32 = arith.constant 0 : i32
    %c0_i32_0 = arith.constant 0 : i32
    %c0_i32_1 = arith.constant 0 : i32
    return %c0_i32, %c0_i32_0 : i32, i32
  }
  func.func @transform_3(%arg0: i32) -> (i32, i32) {
    %c0_i32 = arith.constant 0 : i32
    %c0_i32_0 = arith.constant 0 : i32
    %c0_i32_1 = arith.constant 0 : i32
    return %c0_i32, %c0_i32_0 : i32, i32
  }
  func.func @transform_4(%arg0: i32) -> (i32, i32) {
    %c0_i32 = arith.constant 0 : i32
    %c0_i32_0 = arith.constant 0 : i32
    %c0_i32_1 = arith.constant 0 : i32
    return %c0_i32, %c0_i32_0 : i32, i32
  }
  func.func @transform_5(%arg0: i32) -> (i32, i32) {
    %c0_i32 = arith.constant 0 : i32
    %c0_i32_0 = arith.constant 0 : i32
    %c0_i32_1 = arith.constant 0 : i32
    return %c0_i32, %c0_i32_0 : i32, i32
  }
  func.func @transform_6(%arg0: i32) -> (i32, i32) {
    %c0_i32 = arith.constant 0 : i32
    %c0_i32_0 = arith.constant 0 : i32
    return %arg0, %c0_i32 : i32, i32
  }
  func.func @transform_7(%arg0: i32) -> (i32, i32) {
    %c0_i32 = arith.constant 0 : i32
    %c0_i32_0 = arith.constant 0 : i32
    return %arg0, %c0_i32 : i32, i32
  }
}

</mosaic_0001>

<llo_original>
// kernel: tpu_custom_call.1
$region0: #{tpu_custom_call.1}
  #allocation0 [shape = 'u32[]', space=smem, size = 0x4, offset = 0x4, fixed_abs, tag = 'smem constant byte address 0x4 - core index']
  #allocation1 [shape = 'u32[144,128]{1,0:T(1,128)}', space=vmem, size = 0x12000, scoped, tag = 'internal scratch']
  #allocation2 [shape = 'f32[8,8,128]{2,1,0:T(8,128)}', space=vmem, size = 0x8000, scoped, tag = 'scratch operand']
  %s0 = inlined_call_operand.hbm [shape: f32[8,8,128], index: 0, kind: input, shape index: {}]
  %s1 = inlined_call_operand.hbm [shape: f32[128,128], index: 1, kind: input, shape index: {}]
  %s2 = inlined_call_operand.hbm [shape: f32[128,128], index: 2, kind: input, shape index: {}]
  %s3 = inlined_call_operand.vmem [shape: f32[1,128], index: 3, kind: input, shape index: {}]
  %s4 = inlined_call_operand.hbm [shape: f32[128,128], index: 4, kind: input, shape index: {}]
  %s5 = inlined_call_operand.vmem [shape: f32[1,128], index: 5, kind: input, shape index: {}]
  %s6 = inlined_call_operand.hbm [shape: f32[8,128], index: 6, kind: output, shape index: {0}]
  %s7 = inlined_call_operand.hbm [shape: f32[8,128], index: 7, kind: output, shape index: {1}]
  %8 = xla_tuple %s6, %s7
  %s9 = sld [smem:[#allocation0]]
  $region58: #{tpu_custom_call.1} parent=0
    _
  %s11 = ssub.s32 1, %s9
  %s12 = scalar_select 0, %s11, %s9
  $region1: #{tpu_custom_call.1} parent=0
    #allocation3 [shape = 'u8[32768]{0}', space=vmem, size = 0x8000, scoped, tag = 'input window, operand 0, single buffered']
    #allocation4 [shape = 's32[1]{0}', space=sflag, size = 0x4, scoped, tag = 'scoped memory for tpu_custom_call.1']
    #allocation5 [shape = 's32[1]{0}', space=sflag, size = 0x4, scoped, tag = 'scoped memory for tpu_custom_call.1']
    #allocation6 [shape = 'u8[65536]{0}', space=vmem, size = 0x10000, scoped, tag = 'input window, operand 1, single buffered']
    #allocation7 [shape = 's32[1]{0}', space=sflag, size = 0x4, scoped, tag = 'scoped memory for tpu_custom_call.1']
    #allocation8 [shape = 'u8[65536]{0}', space=vmem, size = 0x10000, scoped, tag = 'input window, operand 2, single buffered']
    #allocation9 [shape = 'u8[65536]{0}', space=vmem, size = 0x10000, scoped, tag = 'input window, operand 4, single buffered']
    #allocation10 [shape = 's32[1]{0}', space=sflag, size = 0x4, scoped, tag = 'scoped memory for tpu_custom_call.1']
    #allocation11 [shape = 'u8[4096]{0}', space=vmem, size = 0x1000, scoped, tag = 'output window, operand 0, single buffered']
    #allocation12 [shape = 'u8[4096]{0}', space=vmem, size = 0x1000, scoped, tag = 'output window, operand 1, single buffered']
    #allocation13 [shape = 's32[1]{0}', space=sflag, size = 0x4, scoped, tag = 'scoped memory for tpu_custom_call.1']
    %13 = vsyncpa [#allocation4], 0
    %14 = vsyncpa [#allocation7], 0
    %15 = vsyncpa [#allocation10], 0
    %16 = vsyncpa [#allocation5], 0
    %17 = vsyncpa [#allocation13], 0
    // Predicated region
    $region2: #{tpu_custom_call.1} parent=1 // pred_check
      _
    $region3: #{tpu_custom_call.1} parent=1 // pred_check_branch
      %19 = sbr.rel (0) target = $region5
    $region4: #{tpu_custom_call.1} parent=1 // pred_region
      %s21 = ssub.s32 1024, 1024
      %22 = vsyncadd [#allocation4], %s21
      %s23 = sshll.u32 [#allocation3], 4
      %s24 = int_to_ptr.vmem [resolvable:$true] %s23
      %29 = dma.hbm_to_vmem [thread:$0]  %s0, 1024, %s24, [#allocation4], 128, 128, 8
    $region5: #{tpu_custom_call.1} parent=1 // pred_fallthru
      _
    // Predicated region
    $region6: #{tpu_custom_call.1} parent=1 // pred_check
      _
    $region7: #{tpu_custom_call.1} parent=1 // pred_check_branch
      %31 = sbr.rel (0) target = $region9
    $region8: #{tpu_custom_call.1} parent=1 // pred_region
      %s33 = ssub.s32 2048, 2048
      %34 = vsyncadd [#allocation7], %s33
      %s35 = sshll.u32 [#allocation6], 4
      %s36 = int_to_ptr.vmem [resolvable:$true] %s35
      %41 = dma.hbm_to_vmem [thread:$0]  %s1, 2048, %s36, [#allocation7], 128, 128, 8
    $region9: #{tpu_custom_call.1} parent=1 // pred_fallthru
      _
    // Predicated region
    $region10: #{tpu_custom_call.1} parent=1 // pred_check
      _
    $region11: #{tpu_custom_call.1} parent=1 // pred_check_branch
      %43 = sbr.rel (0) target = $region13
    $region12: #{tpu_custom_call.1} parent=1 // pred_region
      %s45 = ssub.s32 2048, 2048
      %46 = vsyncadd [#allocation7], %s45
      %s47 = sshll.u32 [#allocation8], 4
      %s48 = int_to_ptr.vmem [resolvable:$true] %s47
      %53 = dma.hbm_to_vmem [thread:$0]  %s2, 2048, %s48, [#allocation7], 128, 128, 8
    $region13: #{tpu_custom_call.1} parent=1 // pred_fallthru
      _
    // Predicated region
    $region14: #{tpu_custom_call.1} parent=1 // pred_check
      _
    $region15: #{tpu_custom_call.1} parent=1 // pred_check_branch
      %55 = sbr.rel (0) target = $region17
    $region16: #{tpu_custom_call.1} parent=1 // pred_region
      _
    $region17: #{tpu_custom_call.1} parent=1 // pred_fallthru
      _
    // Predicated region
    $region18: #{tpu_custom_call.1} parent=1 // pred_check
      _
    $region19: #{tpu_custom_call.1} parent=1 // pred_check_branch
      %57 = sbr.rel (0) target = $region21
    $region20: #{tpu_custom_call.1} parent=1 // pred_region
      %s59 = ssub.s32 2048, 2048
      %60 = vsyncadd [#allocation10], %s59
      %s61 = sshll.u32 [#allocation9], 4
      %s62 = int_to_ptr.vmem [resolvable:$true] %s61
      %67 = dma.hbm_to_vmem [thread:$0]  %s4, 2048, %s62, [#allocation10], 128, 128, 8
    $region21: #{tpu_custom_call.1} parent=1 // pred_fallthru
      _
    // Predicated region
    $region22: #{tpu_custom_call.1} parent=1 // pred_check
      _
    $region23: #{tpu_custom_call.1} parent=1 // pred_check_branch
      %69 = sbr.rel (0) target = $region25
    $region24: #{tpu_custom_call.1} parent=1 // pred_region
      _
    $region25: #{tpu_custom_call.1} parent=1 // pred_fallthru
      _
    // Predicated region
    $region26: #{tpu_custom_call.1} parent=1 // pred_check
      _
    $region27: #{tpu_custom_call.1} parent=1 // pred_check_branch
      %71 = sbr.rel (0) target = $region29
    $region28: #{tpu_custom_call.1} parent=1 // pred_region
      %72 = dma.done [#allocation4], 1024
    $region29: #{tpu_custom_call.1} parent=1 // pred_fallthru
      _
    // Predicated region
    $region30: #{tpu_custom_call.1} parent=1 // pred_check
      _
    $region31: #{tpu_custom_call.1} parent=1 // pred_check_branch
      %74 = sbr.rel (0) target = $region33
    $region32: #{tpu_custom_call.1} parent=1 // pred_region
      %75 = dma.done [#allocation7], 2048
    $region33: #{tpu_custom_call.1} parent=1 // pred_fallthru
      _
    // Predicated region
    $region34: #{tpu_custom_call.1} parent=1 // pred_check
      _
    $region35: #{tpu_custom_call.1} parent=1 // pred_check_branch
      %77 = sbr.rel (0) target = $region37
    $region36: #{tpu_custom_call.1} parent=1 // pred_region
      %78 = dma.done [#allocation7], 2048
    $region37: #{tpu_custom_call.1} parent=1 // pred_fallthru
      _
    // Predicated region
    $region38: #{tpu_custom_call.1} parent=1 // pred_check
      _
    $region39: #{tpu_custom_call.1} parent=1 // pred_check_branch
      %80 = sbr.rel (0) target = $region41
    $region40: #{tpu_custom_call.1} parent=1 // pred_region
      %81 = dma.done [#allocation10], 2048
    $region41: #{tpu_custom_call.1} parent=1 // pred_fallthru
      _
    %v82 = vld [vmem:[#allocation3] sm:$0xff]
    %v83 = vld [vmem:[#allocation3 + $0x8] sm:$0xff]
    %v84 = vld [vmem:[#allocation3 + $0x10] sm:$0xff]
    %v85 = vld [vmem:[#allocation3 + $0x18] sm:$0xff]
    %v86 = vld [vmem:[#allocation3 + $0x20] sm:$0xff]
    %v87 = vld [vmem:[#allocation3 + $0x28] sm:$0xff]
    %v88 = vld [vmem:[#allocation3 + $0x30] sm:$0xff]
    %v89 = vld [vmem:[#allocation3 + $0x38] sm:$0xff]
    %v90 = vld [vmem:[#allocation6] sm:$0xff]
    %v91 = vld [vmem:[#allocation6 + $0x8] sm:$0xff]
    %v92 = vld [vmem:[#allocation6 + $0x10] sm:$0xff]
    %v93 = vld [vmem:[#allocation6 + $0x18] sm:$0xff]
    %v94 = vld [vmem:[#allocation6 + $0x20] sm:$0xff]
    %v95 = vld [vmem:[#allocation6 + $0x28] sm:$0xff]
    %v96 = vld [vmem:[#allocation6 + $0x30] sm:$0xff]
    %v97 = vld [vmem:[#allocation6 + $0x38] sm:$0xff]
    %v98 = vld [vmem:[#allocation6 + $0x40] sm:$0xff]
    %v99 = vld [vmem:[#allocation6 + $0x48] sm:$0xff]
    %v100 = vld [vmem:[#allocation6 + $0x50] sm:$0xff]
    %v101 = vld [vmem:[#allocation6 + $0x58] sm:$0xff]
    %v102 = vld [vmem:[#allocation6 + $0x60] sm:$0xff]
    %v103 = vld [vmem:[#allocation6 + $0x68] sm:$0xff]
    %v104 = vld [vmem:[#allocation6 + $0x70] sm:$0xff]
    %v105 = vld [vmem:[#allocation6 + $0x78] sm:$0xff]
    %v106 = vld [vmem:[%s3] sm:$0x1]
    %v108 = vlaneseq
    %v109 = vshrl.u32 %v108, 7
    %v110 = vsub.s32 0, %v109
    %v111 = vrot.slane %v106, %v110
    %113 = vmatprep.subr.mxu0 0.0
    %114 = vmatpush1.msra.mxu0 %v90
    %115 = vmatprep.subr.mxu0 0.0
    %116 = vmatpush1.msra.mxu0 %v91
    %117 = vmatprep.subr.mxu0 0.0
    %118 = vmatpush1.msra.mxu0 %v92
    %119 = vmatprep.subr.mxu0 0.0
    %120 = vmatpush1.msra.mxu0 %v93
    %121 = vmatprep.subr.mxu0 0.0
    %122 = vmatpush1.msra.mxu0 %v94
    %123 = vmatprep.subr.mxu0 0.0
    %124 = vmatpush1.msra.mxu0 %v95
    %125 = vmatprep.subr.mxu0 0.0
    %126 = vmatpush1.msra.mxu0 %v96
    %127 = vmatprep.subr.mxu0 0.0
    %128 = vmatpush1.msra.mxu0 %v97
    %129 = vmatprep.subr.mxu0 0.0
    %130 = vmatpush1.msra.mxu0 %v98
    %131 = vmatprep.subr.mxu0 0.0
    %132 = vmatpush1.msra.mxu0 %v99
    %133 = vmatprep.subr.mxu0 0.0
    %134 = vmatpush1.msra.mxu0 %v100
    %135 = vmatprep.subr.mxu0 0.0
    %136 = vmatpush1.msra.mxu0 %v101
    %137 = vmatprep.subr.mxu0 0.0
    %138 = vmatpush1.msra.mxu0 %v102
    %139 = vmatprep.subr.mxu0 0.0
    %140 = vmatpush1.msra.mxu0 %v103
    %141 = vmatprep.subr.mxu0 0.0
    %142 = vmatpush1.msra.mxu0 %v104
    %143 = vmatprep.subr.mxu0 0.0
    %144 = vmatpush1.msra.mxu0 %v105
    %145 = vmatprep.subr.mxu0 0.0
    %146 = vmatpush1.msra.mxu0 0.0
    %147 = vmatprep.subr.mxu0 0.0
    %148 = vmatpush1.msra.mxu0 0.0
    %149 = vmatprep.subr.mxu0 0.0
    %150 = vmatpush1.msra.mxu0 0.0
    %151 = vmatprep.subr.mxu0 0.0
    %152 = vmatpush1.msra.mxu0 0.0
    %153 = vmatprep.subr.mxu0 0.0
    %154 = vmatpush1.msra.mxu0 0.0
    %155 = vmatprep.subr.mxu0 0.0
    %156 = vmatpush1.msra.mxu0 0.0
    %157 = vmatprep.subr.mxu0 0.0
    %158 = vmatpush1.msra.mxu0 0.0
    %159 = vmatprep.subr.mxu0 0.0
    %160 = vmatpush1.msra.mxu0 0.0
    %161 = vmatprep.subr.mxu0 0.0
    %162 = vmatpush1.msra.mxu0 0.0
    %163 = vmatprep.subr.mxu0 0.0
    %164 = vmatpush1.msra.mxu0 0.0
    %165 = vmatprep.subr.mxu0 0.0
    %166 = vmatpush1.msra.mxu0 0.0
    %167 = vmatprep.subr.mxu0 0.0
    %168 = vmatpush1.msra.mxu0 0.0
    %169 = vmatprep.subr.mxu0 0.0
    %170 = vmatpush1.msra.mxu0 0.0
    %171 = vmatprep.subr.mxu0 0.0
    %172 = vmatpush1.msra.mxu0 0.0
    %173 = vmatprep.subr.mxu0 0.0
    %174 = vmatpush1.msra.mxu0 0.0
    %175 = vmatprep.subr.mxu0 0.0
    %176 = vmatpush1.msra.mxu0 0.0
    %177 = vmatprep.mubr.f32.mxu0 0.0
    %178 = vmatmul.mubr.f32.gmra.mrb[0].mxu0 %v82
    %v179 = vpop.f32.mrb[0].mxu0
    %v180 = vadd.f32 %v111, %v179
    %v181 = vpop.f32.mrb[0].mxu0
    %182 = vmatprep.mubr.f32.mxu0 0.0
    %183 = vmatmul.mubr.f32.gmra.mrb[0].mxu0 %v83
    %v184 = vpop.f32.mrb[0].mxu0
    %v185 = vadd.f32 %v111, %v184
    %v186 = vpop.f32.mrb[0].mxu0
    %187 = vmatprep.mubr.f32.mxu0 0.0
    %188 = vmatmul.mubr.f32.gmra.mrb[0].mxu0 %v84
    %v189 = vpop.f32.mrb[0].mxu0
    %v190 = vadd.f32 %v111, %v189
    %v191 = vpop.f32.mrb[0].mxu0
    %192 = vmatprep.mubr.f32.mxu0 0.0
    %193 = vmatmul.mubr.f32.gmra.mrb[0].mxu0 %v85
    %v194 = vpop.f32.mrb[0].mxu0
    %v195 = vadd.f32 %v111, %v194
    %v196 = vpop.f32.mrb[0].mxu0
    %197 = vmatprep.mubr.f32.mxu0 0.0
    %198 = vmatmul.mubr.f32.gmra.mrb[0].mxu0 %v86
    %v199 = vpop.f32.mrb[0].mxu0
    %v200 = vadd.f32 %v111, %v199
    %v201 = vpop.f32.mrb[0].mxu0
    %202 = vmatprep.mubr.f32.mxu0 0.0
    %203 = vmatmul.mubr.f32.gmra.mrb[0].mxu0 %v87
    %v204 = vpop.f32.mrb[0].mxu0
    %v205 = vadd.f32 %v111, %v204
    %v206 = vpop.f32.mrb[0].mxu0
    %207 = vmatprep.mubr.f32.mxu0 0.0
    %208 = vmatmul.mubr.f32.gmra.mrb[0].mxu0 %v88
    %v209 = vpop.f32.mrb[0].mxu0
    %v210 = vadd.f32 %v111, %v209
    %v211 = vpop.f32.mrb[0].mxu0
    %212 = vmatprep.mubr.f32.mxu0 0.0
    %213 = vmatmul.mubr.f32.gmra.mrb[0].mxu0 %v89
    %v214 = vpop.f32.mrb[0].mxu0
    %v215 = vadd.f32 %v111, %v214
    %v216 = vpop.f32.mrb[0].mxu0
    %217 = vdwg.mxu0
    %218 = vst [vmem:[#allocation2] sm:$0xff] %v180
    %219 = vst [vmem:[#allocation2 + $0x8] sm:$0xff] %v185
    %220 = vst [vmem:[#allocation2 + $0x10] sm:$0xff] %v190
    %221 = vst [vmem:[#allocation2 + $0x18] sm:$0xff] %v195
    %222 = vst [vmem:[#allocation2 + $0x20] sm:$0xff] %v200
    %223 = vst [vmem:[#allocation2 + $0x28] sm:$0xff] %v205
    %224 = vst [vmem:[#allocation2 + $0x30] sm:$0xff] %v210
    %225 = vst [vmem:[#allocation2 + $0x38] sm:$0xff] %v215
    %v226 = vld [vmem:[#allocation8] sm:$0xff]
    %v227 = vld [vmem:[#allocation8 + $0x8] sm:$0xff]
    %v228 = vld [vmem:[#allocation8 + $0x10] sm:$0xff]
    %v229 = vld [vmem:[#allocation8 + $0x18] sm:$0xff]
    %v230 = vld [vmem:[#allocation8 + $0x20] sm:$0xff]
    %v231 = vld [vmem:[#allocation8 + $0x28] sm:$0xff]
    %v232 = vld [vmem:[#allocation8 + $0x30] sm:$0xff]
    %v233 = vld [vmem:[#allocation8 + $0x38] sm:$0xff]
    %v234 = vld [vmem:[#allocation8 + $0x40] sm:$0xff]
    %v235 = vld [vmem:[#allocation8 + $0x48] sm:$0xff]
    %v236 = vld [vmem:[#allocation8 + $0x50] sm:$0xff]
    %v237 = vld [vmem:[#allocation8 + $0x58] sm:$0xff]
    %v238 = vld [vmem:[#allocation8 + $0x60] sm:$0xff]
    %v239 = vld [vmem:[#allocation8 + $0x68] sm:$0xff]
    %v240 = vld [vmem:[#allocation8 + $0x70] sm:$0xff]
    %v241 = vld [vmem:[#allocation8 + $0x78] sm:$0xff]
    %v242 = vld [vmem:[#allocation2] sm:$0xff]
    %243 = vmatprep.subr.mxu0 0.0
    %244 = vmatpush1.msra.mxu0 %v226
    %245 = vmatprep.subr.mxu0 0.0
    %246 = vmatpush1.msra.mxu0 %v227
    %247 = vmatprep.subr.mxu0 0.0
    %248 = vmatpush1.msra.mxu0 %v228
    %249 = vmatprep.subr.mxu0 0.0
    %250 = vmatpush1.msra.mxu0 %v229
    %251 = vmatprep.subr.mxu0 0.0
    %252 = vmatpush1.msra.mxu0 %v230
    %253 = vmatprep.subr.mxu0 0.0
    %254 = vmatpush1.msra.mxu0 %v231
    %255 = vmatprep.subr.mxu0 0.0
    %256 = vmatpush1.msra.mxu0 %v232
    %257 = vmatprep.subr.mxu0 0.0
    %258 = vmatpush1.msra.mxu0 %v233
    %259 = vmatprep.subr.mxu0 0.0
    %260 = vmatpush1.msra.mxu0 %v234
    %261 = vmatprep.subr.mxu0 0.0
    %262 = vmatpush1.msra.mxu0 %v235
    %263 = vmatprep.subr.mxu0 0.0
    %264 = vmatpush1.msra.mxu0 %v236
    %265 = vmatprep.subr.mxu0 0.0
    %266 = vmatpush1.msra.mxu0 %v237
    %267 = vmatprep.subr.mxu0 0.0
    %268 = vmatpush1.msra.mxu0 %v238
    %269 = vmatprep.subr.mxu0 0.0
    %270 = vmatpush1.msra.mxu0 %v239
    %271 = vmatprep.subr.mxu0 0.0
    %272 = vmatpush1.msra.mxu0 %v240
    %273 = vmatprep.subr.mxu0 0.0
    %274 = vmatpush1.msra.mxu0 %v241
    %275 = vmatprep.subr.mxu0 0.0
    %276 = vmatpush1.msra.mxu0 0.0
    %277 = vmatprep.subr.mxu0 0.0
    %278 = vmatpush1.msra.mxu0 0.0
    %279 = vmatprep.subr.mxu0 0.0
    %280 = vmatpush1.msra.mxu0 0.0
    %281 = vmatprep.subr.mxu0 0.0
    %282 = vmatpush1.msra.mxu0 0.0
    %283 = vmatprep.subr.mxu0 0.0
    %284 = vmatpush1.msra.mxu0 0.0
    %285 = vmatprep.subr.mxu0 0.0
    %286 = vmatpush1.msra.mxu0 0.0
    %287 = vmatprep.subr.mxu0 0.0
    %288 = vmatpush1.msra.mxu0 0.0
    %289 = vmatprep.subr.mxu0 0.0
    %290 = vmatpush1.msra.mxu0 0.0
    %291 = vmatprep.subr.mxu0 0.0
    %292 = vmatpush1.msra.mxu0 0.0
    %293 = vmatprep.subr.mxu0 0.0
    %294 = vmatpush1.msra.mxu0 0.0
    %295 = vmatprep.subr.mxu0 0.0
    %296 = vmatpush1.msra.mxu0 0.0
    %297 = vmatprep.subr.mxu0 0.0
    %298 = vmatpush1.msra.mxu0 0.0
    %299 = vmatprep.subr.mxu0 0.0
    %300 = vmatpush1.msra.mxu0 0.0
    %301 = vmatprep.subr.mxu0 0.0
    %302 = vmatpush1.msra.mxu0 0.0
    %303 = vmatprep.subr.mxu0 0.0
    %304 = vmatpush1.msra.mxu0 0.0
    %305 = vmatprep.subr.mxu0 0.0
    %306 = vmatpush1.msra.mxu0 0.0
    %307 = vmatprep.mubr.f32.mxu0 0.0
    %308 = vmatmul.mubr.f32.gmra.mrb[0].mxu0 0.0
    %v309 = vpop.f32.mrb[0].mxu0
    %v310 = vadd.f32 0.0, %v309
    %v311 = vpop.f32.mrb[0].mxu0
    %312 = vdwg.mxu0
    %v313 = vadd.f32 %v242, %v310
    %v314 = vtanh.pop %v313
    %s315 = scalar_lea.vmem [#allocation2], 8
    %v316 = vld [vmem:[%s315] sm:$0xff]
    %317 = vmatprep.subr.mxu0 0.0
    %318 = vmatpush1.msra.mxu0 %v226
    %319 = vmatprep.subr.mxu0 0.0
    %320 = vmatpush1.msra.mxu0 %v227
    %321 = vmatprep.subr.mxu0 0.0
    %322 = vmatpush1.msra.mxu0 %v228
    %323 = vmatprep.subr.mxu0 0.0
    %324 = vmatpush1.msra.mxu0 %v229
    %325 = vmatprep.subr.mxu0 0.0
    %326 = vmatpush1.msra.mxu0 %v230
    %327 = vmatprep.subr.mxu0 0.0
    %328 = vmatpush1.msra.mxu0 %v231
    %329 = vmatprep.subr.mxu0 0.0
    %330 = vmatpush1.msra.mxu0 %v232
    %331 = vmatprep.subr.mxu0 0.0
    %332 = vmatpush1.msra.mxu0 %v233
    %333 = vmatprep.subr.mxu0 0.0
    %334 = vmatpush1.msra.mxu0 %v234
    %335 = vmatprep.subr.mxu0 0.0
    %336 = vmatpush1.msra.mxu0 %v235
    %337 = vmatprep.subr.mxu0 0.0
    %338 = vmatpush1.msra.mxu0 %v236
    %339 = vmatprep.subr.mxu0 0.0
    %340 = vmatpush1.msra.mxu0 %v237
    %341 = vmatprep.subr.mxu0 0.0
    %342 = vmatpush1.msra.mxu0 %v238
    %343 = vmatprep.subr.mxu0 0.0
    %344 = vmatpush1.msra.mxu0 %v239
    %345 = vmatprep.subr.mxu0 0.0
    %346 = vmatpush1.msra.mxu0 %v240
    %347 = vmatprep.subr.mxu0 0.0
    %348 = vmatpush1.msra.mxu0 %v241
    %349 = vmatprep.subr.mxu0 0.0
    %350 = vmatpush1.msra.mxu0 0.0
    %351 = vmatprep.subr.mxu0 0.0
    %352 = vmatpush1.msra.mxu0 0.0
    %353 = vmatprep.subr.mxu0 0.0
    %354 = vmatpush1.msra.mxu0 0.0
    %355 = vmatprep.subr.mxu0 0.0
    %356 = vmatpush1.msra.mxu0 0.0
    %357 = vmatprep.subr.mxu0 0.0
    %358 = vmatpush1.msra.mxu0 0.0
    %359 = vmatprep.subr.mxu0 0.0
    %360 = vmatpush1.msra.mxu0 0.0
    %361 = vmatprep.subr.mxu0 0.0
    %362 = vmatpush1.msra.mxu0 0.0
    %363 = vmatprep.subr.mxu0 0.0
    %364 = vmatpush1.msra.mxu0 0.0
    %365 = vmatprep.subr.mxu0 0.0
    %366 = vmatpush1.msra.mxu0 0.0
    %367 = vmatprep.subr.mxu0 0.0
    %368 = vmatpush1.msra.mxu0 0.0
    %369 = vmatprep.subr.mxu0 0.0
    %370 = vmatpush1.msra.mxu0 0.0
    %371 = vmatprep.subr.mxu0 0.0
    %372 = vmatpush1.msra.mxu0 0.0
    %373 = vmatprep.subr.mxu0 0.0
    %374 = vmatpush1.msra.mxu0 0.0
    %375 = vmatprep.subr.mxu0 0.0
    %376 = vmatpush1.msra.mxu0 0.0
    %377 = vmatprep.subr.mxu0 0.0
    %378 = vmatpush1.msra.mxu0 0.0
    %379 = vmatprep.subr.mxu0 0.0
    %380 = vmatpush1.msra.mxu0 0.0
    %381 = vmatprep.mubr.f32.mxu0 0.0
    %382 = vmatmul.mubr.f32.gmra.mrb[0].mxu0 %v314
    %v383 = vpop.f32.mrb[0].mxu0
    %v384 = vadd.f32 0.0, %v383
    %v385 = vpop.f32.mrb[0].mxu0
    %386 = vdwg.mxu0
    %v387 = vadd.f32 %v316, %v384
    %v388 = vtanh.pop %v387
    %s389 = scalar_lea.vmem [#allocation2], 16
    %v390 = vld [vmem:[%s389] sm:$0xff]
    %391 = vmatprep.subr.mxu0 0.0
    %392 = vmatpush1.msra.mxu0 %v226
    %393 = vmatprep.subr.mxu0 0.0
    %394 = vmatpush1.msra.mxu0 %v227
    %395 = vmatprep.subr.mxu0 0.0
    %396 = vmatpush1.msra.mxu0 %v228
    %397 = vmatprep.subr.mxu0 0.0
    %398 = vmatpush1.msra.mxu0 %v229
    %399 = vmatprep.subr.mxu0 0.0
    %400 = vmatpush1.msra.mxu0 %v230
    %401 = vmatprep.subr.mxu0 0.0
    %402 = vmatpush1.msra.mxu0 %v231
    %403 = vmatprep.subr.mxu0 0.0
    %404 = vmatpush1.msra.mxu0 %v232
    %405 = vmatprep.subr.mxu0 0.0
    %406 = vmatpush1.msra.mxu0 %v233
    %407 = vmatprep.subr.mxu0 0.0
    %408 = vmatpush1.msra.mxu0 %v234
    %409 = vmatprep.subr.mxu0 0.0
    %410 = vmatpush1.msra.mxu0 %v235
    %411 = vmatprep.subr.mxu0 0.0
    %412 = vmatpush1.msra.mxu0 %v236
    %413 = vmatprep.subr.mxu0 0.0
    %414 = vmatpush1.msra.mxu0 %v237
    %415 = vmatprep.subr.mxu0 0.0
    %416 = vmatpush1.msra.mxu0 %v238
    %417 = vmatprep.subr.mxu0 0.0
    %418 = vmatpush1.msra.mxu0 %v239
    %419 = vmatprep.subr.mxu0 0.0
    %420 = vmatpush1.msra.mxu0 %v240
    %421 = vmatprep.subr.mxu0 0.0
    %422 = vmatpush1.msra.mxu0 %v241
    %423 = vmatprep.subr.mxu0 0.0
    %424 = vmatpush1.msra.mxu0 0.0
    %425 = vmatprep.subr.mxu0 0.0
    %426 = vmatpush1.msra.mxu0 0.0
    %427 = vmatprep.subr.mxu0 0.0
    %428 = vmatpush1.msra.mxu0 0.0
    %429 = vmatprep.subr.mxu0 0.0
    %430 = vmatpush1.msra.mxu0 0.0
    %431 = vmatprep.subr.mxu0 0.0
    %432 = vmatpush1.msra.mxu0 0.0
    %433 = vmatprep.subr.mxu0 0.0
    %434 = vmatpush1.msra.mxu0 0.0
    %435 = vmatprep.subr.mxu0 0.0
    %436 = vmatpush1.msra.mxu0 0.0
    %437 = vmatprep.subr.mxu0 0.0
    %438 = vmatpush1.msra.mxu0 0.0
    %439 = vmatprep.subr.mxu0 0.0
    %440 = vmatpush1.msra.mxu0 0.0
    %441 = vmatprep.subr.mxu0 0.0
    %442 = vmatpush1.msra.mxu0 0.0
    %443 = vmatprep.subr.mxu0 0.0
    %444 = vmatpush1.msra.mxu0 0.0
    %445 = vmatprep.subr.mxu0 0.0
    %446 = vmatpush1.msra.mxu0 0.0
    %447 = vmatprep.subr.mxu0 0.0
    %448 = vmatpush1.msra.mxu0 0.0
    %449 = vmatprep.subr.mxu0 0.0
    %450 = vmatpush1.msra.mxu0 0.0
    %451 = vmatprep.subr.mxu0 0.0
    %452 = vmatpush1.msra.mxu0 0.0
    %453 = vmatprep.subr.mxu0 0.0
    %454 = vmatpush1.msra.mxu0 0.0
    %455 = vmatprep.mubr.f32.mxu0 0.0
    %456 = vmatmul.mubr.f32.gmra.mrb[0].mxu0 %v388
    %v457 = vpop.f32.mrb[0].mxu0
    %v458 = vadd.f32 0.0, %v457
    %v459 = vpop.f32.mrb[0].mxu0
    %460 = vdwg.mxu0
    %v461 = vadd.f32 %v390, %v458
    %v462 = vtanh.pop %v461
    %s463 = scalar_lea.vmem [#allocation2], 24
    %v464 = vld [vmem:[%s463] sm:$0xff]
    %465 = vmatprep.subr.mxu0 0.0
    %466 = vmatpush1.msra.mxu0 %v226
    %467 = vmatprep.subr.mxu0 0.0
    %468 = vmatpush1.msra.mxu0 %v227
    %469 = vmatprep.subr.mxu0 0.0
    %470 = vmatpush1.msra.mxu0 %v228
    %471 = vmatprep.subr.mxu0 0.0
    %472 = vmatpush1.msra.mxu0 %v229
    %473 = vmatprep.subr.mxu0 0.0
    %474 = vmatpush1.msra.mxu0 %v230
    %475 = vmatprep.subr.mxu0 0.0
    %476 = vmatpush1.msra.mxu0 %v231
    %477 = vmatprep.subr.mxu0 0.0
    %478 = vmatpush1.msra.mxu0 %v232
    %479 = vmatprep.subr.mxu0 0.0
    %480 = vmatpush1.msra.mxu0 %v233
    %481 = vmatprep.subr.mxu0 0.0
    %482 = vmatpush1.msra.mxu0 %v234
    %483 = vmatprep.subr.mxu0 0.0
    %484 = vmatpush1.msra.mxu0 %v235
    %485 = vmatprep.subr.mxu0 0.0
    %486 = vmatpush1.msra.mxu0 %v236
    %487 = vmatprep.subr.mxu0 0.0
    %488 = vmatpush1.msra.mxu0 %v237
    %489 = vmatprep.subr.mxu0 0.0
    %490 = vmatpush1.msra.mxu0 %v238
    %491 = vmatprep.subr.mxu0 0.0
    %492 = vmatpush1.msra.mxu0 %v239
    %493 = vmatprep.subr.mxu0 0.0
    %494 = vmatpush1.msra.mxu0 %v240
    %495 = vmatprep.subr.mxu0 0.0
    %496 = vmatpush1.msra.mxu0 %v241
    %497 = vmatprep.subr.mxu0 0.0
    %498 = vmatpush1.msra.mxu0 0.0
    %499 = vmatprep.subr.mxu0 0.0
    %500 = vmatpush1.msra.mxu0 0.0
    %501 = vmatprep.subr.mxu0 0.0
    %502 = vmatpush1.msra.mxu0 0.0
    %503 = vmatprep.subr.mxu0 0.0
    %504 = vmatpush1.msra.mxu0 0.0
    %505 = vmatprep.subr.mxu0 0.0
    %506 = vmatpush1.msra.mxu0 0.0
    %507 = vmatprep.subr.mxu0 0.0
    %508 = vmatpush1.msra.mxu0 0.0
    %509 = vmatprep.subr.mxu0 0.0
    %510 = vmatpush1.msra.mxu0 0.0
    %511 = vmatprep.subr.mxu0 0.0
    %512 = vmatpush1.msra.mxu0 0.0
    %513 = vmatprep.subr.mxu0 0.0
    %514 = vmatpush1.msra.mxu0 0.0
    %515 = vmatprep.subr.mxu0 0.0
    %516 = vmatpush1.msra.mxu0 0.0
    %517 = vmatprep.subr.mxu0 0.0
    %518 = vmatpush1.msra.mxu0 0.0
    %519 = vmatprep.subr.mxu0 0.0
    %520 = vmatpush1.msra.mxu0 0.0
    %521 = vmatprep.subr.mxu0 0.0
    %522 = vmatpush1.msra.mxu0 0.0
    %523 = vmatprep.subr.mxu0 0.0
    %524 = vmatpush1.msra.mxu0 0.0
    %525 = vmatprep.subr.mxu0 0.0
    %526 = vmatpush1.msra.mxu0 0.0
    %527 = vmatprep.subr.mxu0 0.0
    %528 = vmatpush1.msra.mxu0 0.0
    %529 = vmatprep.mubr.f32.mxu0 0.0
    %530 = vmatmul.mubr.f32.gmra.mrb[0].mxu0 %v462
    %v531 = vpop.f32.mrb[0].mxu0
    %v532 = vadd.f32 0.0, %v531
    %v533 = vpop.f32.mrb[0].mxu0
    %534 = vdwg.mxu0
    %v535 = vadd.f32 %v464, %v532
    %v536 = vtanh.pop %v535
    %s537 = scalar_lea.vmem [#allocation2], 32
    %v538 = vld [vmem:[%s537] sm:$0xff]
    %539 = vmatprep.subr.mxu0 0.0
    %540 = vmatpush1.msra.mxu0 %v226
    %541 = vmatprep.subr.mxu0 0.0
    %542 = vmatpush1.msra.mxu0 %v227
    %543 = vmatprep.subr.mxu0 0.0
    %544 = vmatpush1.msra.mxu0 %v228
    %545 = vmatprep.subr.mxu0 0.0
    %546 = vmatpush1.msra.mxu0 %v229
    %547 = vmatprep.subr.mxu0 0.0
    %548 = vmatpush1.msra.mxu0 %v230
    %549 = vmatprep.subr.mxu0 0.0
    %550 = vmatpush1.msra.mxu0 %v231
    %551 = vmatprep.subr.mxu0 0.0
    %552 = vmatpush1.msra.mxu0 %v232
    %553 = vmatprep.subr.mxu0 0.0
    %554 = vmatpush1.msra.mxu0 %v233
    %555 = vmatprep.subr.mxu0 0.0
    %556 = vmatpush1.msra.mxu0 %v234
    %557 = vmatprep.subr.mxu0 0.0
    %558 = vmatpush1.msra.mxu0 %v235
    %559 = vmatprep.subr.mxu0 0.0
    %560 = vmatpush1.msra.mxu0 %v236
    %561 = vmatprep.subr.mxu0 0.0
    %562 = vmatpush1.msra.mxu0 %v237
    %563 = vmatprep.subr.mxu0 0.0
    %564 = vmatpush1.msra.mxu0 %v238
    %565 = vmatprep.subr.mxu0 0.0
    %566 = vmatpush1.msra.mxu0 %v239
    %567 = vmatprep.subr.mxu0 0.0
    %568 = vmatpush1.msra.mxu0 %v240
    %569 = vmatprep.subr.mxu0 0.0
    %570 = vmatpush1.msra.mxu0 %v241
    %571 = vmatprep.subr.mxu0 0.0
    %572 = vmatpush1.msra.mxu0 0.0
    %573 = vmatprep.subr.mxu0 0.0
    %574 = vmatpush1.msra.mxu0 0.0
    %575 = vmatprep.subr.mxu0 0.0
    %576 = vmatpush1.msra.mxu0 0.0
    %577 = vmatprep.subr.mxu0 0.0
    %578 = vmatpush1.msra.mxu0 0.0
    %579 = vmatprep.subr.mxu0 0.0
    %580 = vmatpush1.msra.mxu0 0.0
    %581 = vmatprep.subr.mxu0 0.0
    %582 = vmatpush1.msra.mxu0 0.0
    %583 = vmatprep.subr.mxu0 0.0
    %584 = vmatpush1.msra.mxu0 0.0
    %585 = vmatprep.subr.mxu0 0.0
    %586 = vmatpush1.msra.mxu0 0.0
    %587 = vmatprep.subr.mxu0 0.0
    %588 = vmatpush1.msra.mxu0 0.0
    %589 = vmatprep.subr.mxu0 0.0
    %590 = vmatpush1.msra.mxu0 0.0
    %591 = vmatprep.subr.mxu0 0.0
    %592 = vmatpush1.msra.mxu0 0.0
    %593 = vmatprep.subr.mxu0 0.0
    %594 = vmatpush1.msra.mxu0 0.0
    %595 = vmatprep.subr.mxu0 0.0
    %596 = vmatpush1.msra.mxu0 0.0
    %597 = vmatprep.subr.mxu0 0.0
    %598 = vmatpush1.msra.mxu0 0.0
    %599 = vmatprep.subr.mxu0 0.0
    %600 = vmatpush1.msra.mxu0 0.0
    %601 = vmatprep.subr.mxu0 0.0
    %602 = vmatpush1.msra.mxu0 0.0
    %603 = vmatprep.mubr.f32.mxu0 0.0
    %604 = vmatmul.mubr.f32.gmra.mrb[0].mxu0 %v536
    %v605 = vpop.f32.mrb[0].mxu0
    %v606 = vadd.f32 0.0, %v605
    %v607 = vpop.f32.mrb[0].mxu0
    %608 = vdwg.mxu0
    %v609 = vadd.f32 %v538, %v606
    %v610 = vtanh.pop %v609
    %s611 = scalar_lea.vmem [#allocation2], 40
    %v612 = vld [vmem:[%s611] sm:$0xff]
    %613 = vmatprep.subr.mxu0 0.0
    %614 = vmatpush1.msra.mxu0 %v226
    %615 = vmatprep.subr.mxu0 0.0
    %616 = vmatpush1.msra.mxu0 %v227
    %617 = vmatprep.subr.mxu0 0.0
    %618 = vmatpush1.msra.mxu0 %v228
    %619 = vmatprep.subr.mxu0 0.0
    %620 = vmatpush1.msra.mxu0 %v229
    %621 = vmatprep.subr.mxu0 0.0
    %622 = vmatpush1.msra.mxu0 %v230
    %623 = vmatprep.subr.mxu0 0.0
    %624 = vmatpush1.msra.mxu0 %v231
    %625 = vmatprep.subr.mxu0 0.0
    %626 = vmatpush1.msra.mxu0 %v232
    %627 = vmatprep.subr.mxu0 0.0
    %628 = vmatpush1.msra.mxu0 %v233
    %629 = vmatprep.subr.mxu0 0.0
    %630 = vmatpush1.msra.mxu0 %v234
    %631 = vmatprep.subr.mxu0 0.0
    %632 = vmatpush1.msra.mxu0 %v235
    %633 = vmatprep.subr.mxu0 0.0
    %634 = vmatpush1.msra.mxu0 %v236
    %635 = vmatprep.subr.mxu0 0.0
    %636 = vmatpush1.msra.mxu0 %v237
    %637 = vmatprep.subr.mxu0 0.0
    %638 = vmatpush1.msra.mxu0 %v238
    %639 = vmatprep.subr.mxu0 0.0
    %640 = vmatpush1.msra.mxu0 %v239
    %641 = vmatprep.subr.mxu0 0.0
    %642 = vmatpush1.msra.mxu0 %v240
    %643 = vmatprep.subr.mxu0 0.0
    %644 = vmatpush1.msra.mxu0 %v241
    %645 = vmatprep.subr.mxu0 0.0
    %646 = vmatpush1.msra.mxu0 0.0
    %647 = vmatprep.subr.mxu0 0.0
    %648 = vmatpush1.msra.mxu0 0.0
    %649 = vmatprep.subr.mxu0 0.0
    %650 = vmatpush1.msra.mxu0 0.0
    %651 = vmatprep.subr.mxu0 0.0
    %652 = vmatpush1.msra.mxu0 0.0
    %653 = vmatprep.subr.mxu0 0.0
    %654 = vmatpush1.msra.mxu0 0.0
    %655 = vmatprep.subr.mxu0 0.0
    %656 = vmatpush1.msra.mxu0 0.0
    %657 = vmatprep.subr.mxu0 0.0
    %658 = vmatpush1.msra.mxu0 0.0
    %659 = vmatprep.subr.mxu0 0.0
    %660 = vmatpush1.msra.mxu0 0.0
    %661 = vmatprep.subr.mxu0 0.0
    %662 = vmatpush1.msra.mxu0 0.0
    %663 = vmatprep.subr.mxu0 0.0
    %664 = vmatpush1.msra.mxu0 0.0
    %665 = vmatprep.subr.mxu0 0.0
    %666 = vmatpush1.msra.mxu0 0.0
    %667 = vmatprep.subr.mxu0 0.0
    %668 = vmatpush1.msra.mxu0 0.0
    %669 = vmatprep.subr.mxu0 0.0
    %670 = vmatpush1.msra.mxu0 0.0
    %671 = vmatprep.subr.mxu0 0.0
    %672 = vmatpush1.msra.mxu0 0.0
    %673 = vmatprep.subr.mxu0 0.0
    %674 = vmatpush1.msra.mxu0 0.0
    %675 = vmatprep.subr.mxu0 0.0
    %676 = vmatpush1.msra.mxu0 0.0
    %677 = vmatprep.mubr.f32.mxu0 0.0
    %678 = vmatmul.mubr.f32.gmra.mrb[0].mxu0 %v610
    %v679 = vpop.f32.mrb[0].mxu0
    %v680 = vadd.f32 0.0, %v679
    %v681 = vpop.f32.mrb[0].mxu0
    %682 = vdwg.mxu0
    %v683 = vadd.f32 %v612, %v680
    %v684 = vtanh.pop %v683
    %s685 = scalar_lea.vmem [#allocation2], 48
    %v686 = vld [vmem:[%s685] sm:$0xff]
    %687 = vmatprep.subr.mxu0 0.0
    %688 = vmatpush1.msra.mxu0 %v226
    %689 = vmatprep.subr.mxu0 0.0
    %690 = vmatpush1.msra.mxu0 %v227
    %691 = vmatprep.subr.mxu0 0.0
    %692 = vmatpush1.msra.mxu0 %v228
    %693 = vmatprep.subr.mxu0 0.0
    %694 = vmatpush1.msra.mxu0 %v229
    %695 = vmatprep.subr.mxu0 0.0
    %696 = vmatpush1.msra.mxu0 %v230
    %697 = vmatprep.subr.mxu0 0.0
    %698 = vmatpush1.msra.mxu0 %v231
    %699 = vmatprep.subr.mxu0 0.0
    %700 = vmatpush1.msra.mxu0 %v232
    %701 = vmatprep.subr.mxu0 0.0
    %702 = vmatpush1.msra.mxu0 %v233
    %703 = vmatprep.subr.mxu0 0.0
    %704 = vmatpush1.msra.mxu0 %v234
    %705 = vmatprep.subr.mxu0 0.0
    %706 = vmatpush1.msra.mxu0 %v235
    %707 = vmatprep.subr.mxu0 0.0
    %708 = vmatpush1.msra.mxu0 %v236
    %709 = vmatprep.subr.mxu0 0.0
    %710 = vmatpush1.msra.mxu0 %v237
    %711 = vmatprep.subr.mxu0 0.0
    %712 = vmatpush1.msra.mxu0 %v238
    %713 = vmatprep.subr.mxu0 0.0
    %714 = vmatpush1.msra.mxu0 %v239
    %715 = vmatprep.subr.mxu0 0.0
    %716 = vmatpush1.msra.mxu0 %v240
    %717 = vmatprep.subr.mxu0 0.0
    %718 = vmatpush1.msra.mxu0 %v241
    %719 = vmatprep.subr.mxu0 0.0
    %720 = vmatpush1.msra.mxu0 0.0
    %721 = vmatprep.subr.mxu0 0.0
    %722 = vmatpush1.msra.mxu0 0.0
    %723 = vmatprep.subr.mxu0 0.0
    %724 = vmatpush1.msra.mxu0 0.0
    %725 = vmatprep.subr.mxu0 0.0
    %726 = vmatpush1.msra.mxu0 0.0
    %727 = vmatprep.subr.mxu0 0.0
    %728 = vmatpush1.msra.mxu0 0.0
    %729 = vmatprep.subr.mxu0 0.0
    %730 = vmatpush1.msra.mxu0 0.0
    %731 = vmatprep.subr.mxu0 0.0
    %732 = vmatpush1.msra.mxu0 0.0
    %733 = vmatprep.subr.mxu0 0.0
    %734 = vmatpush1.msra.mxu0 0.0
    %735 = vmatprep.subr.mxu0 0.0
    %736 = vmatpush1.msra.mxu0 0.0
    %737 = vmatprep.subr.mxu0 0.0
    %738 = vmatpush1.msra.mxu0 0.0
    %739 = vmatprep.subr.mxu0 0.0
    %740 = vmatpush1.msra.mxu0 0.0
    %741 = vmatprep.subr.mxu0 0.0
    %742 = vmatpush1.msra.mxu0 0.0
    %743 = vmatprep.subr.mxu0 0.0
    %744 = vmatpush1.msra.mxu0 0.0
    %745 = vmatprep.subr.mxu0 0.0
    %746 = vmatpush1.msra.mxu0 0.0
    %747 = vmatprep.subr.mxu0 0.0
    %748 = vmatpush1.msra.mxu0 0.0
    %749 = vmatprep.subr.mxu0 0.0
    %750 = vmatpush1.msra.mxu0 0.0
    %751 = vmatprep.mubr.f32.mxu0 0.0
    %752 = vmatmul.mubr.f32.gmra.mrb[0].mxu0 %v684
    %v753 = vpop.f32.mrb[0].mxu0
    %v754 = vadd.f32 0.0, %v753
    %v755 = vpop.f32.mrb[0].mxu0
    %756 = vdwg.mxu0
    %v757 = vadd.f32 %v686, %v754
    %v758 = vtanh.pop %v757
    %s759 = scalar_lea.vmem [#allocation2], 56
    %v760 = vld [vmem:[%s759] sm:$0xff]
    %761 = vmatprep.subr.mxu0 0.0
    %762 = vmatpush1.msra.mxu0 %v226
    %763 = vmatprep.subr.mxu0 0.0
    %764 = vmatpush1.msra.mxu0 %v227
    %765 = vmatprep.subr.mxu0 0.0
    %766 = vmatpush1.msra.mxu0 %v228
    %767 = vmatprep.subr.mxu0 0.0
    %768 = vmatpush1.msra.mxu0 %v229
    %769 = vmatprep.subr.mxu0 0.0
    %770 = vmatpush1.msra.mxu0 %v230
    %771 = vmatprep.subr.mxu0 0.0
    %772 = vmatpush1.msra.mxu0 %v231
    %773 = vmatprep.subr.mxu0 0.0
    %774 = vmatpush1.msra.mxu0 %v232
    %775 = vmatprep.subr.mxu0 0.0
    %776 = vmatpush1.msra.mxu0 %v233
    %777 = vmatprep.subr.mxu0 0.0
    %778 = vmatpush1.msra.mxu0 %v234
    %779 = vmatprep.subr.mxu0 0.0
    %780 = vmatpush1.msra.mxu0 %v235
    %781 = vmatprep.subr.mxu0 0.0
    %782 = vmatpush1.msra.mxu0 %v236
    %783 = vmatprep.subr.mxu0 0.0
    %784 = vmatpush1.msra.mxu0 %v237
    %785 = vmatprep.subr.mxu0 0.0
    %786 = vmatpush1.msra.mxu0 %v238
    %787 = vmatprep.subr.mxu0 0.0
    %788 = vmatpush1.msra.mxu0 %v239
    %789 = vmatprep.subr.mxu0 0.0
    %790 = vmatpush1.msra.mxu0 %v240
    %791 = vmatprep.subr.mxu0 0.0
    %792 = vmatpush1.msra.mxu0 %v241
    %793 = vmatprep.subr.mxu0 0.0
    %794 = vmatpush1.msra.mxu0 0.0
    %795 = vmatprep.subr.mxu0 0.0
    %796 = vmatpush1.msra.mxu0 0.0
    %797 = vmatprep.subr.mxu0 0.0
    %798 = vmatpush1.msra.mxu0 0.0
    %799 = vmatprep.subr.mxu0 0.0
    %800 = vmatpush1.msra.mxu0 0.0
    %801 = vmatprep.subr.mxu0 0.0
    %802 = vmatpush1.msra.mxu0 0.0
    %803 = vmatprep.subr.mxu0 0.0
    %804 = vmatpush1.msra.mxu0 0.0
    %805 = vmatprep.subr.mxu0 0.0
    %806 = vmatpush1.msra.mxu0 0.0
    %807 = vmatprep.subr.mxu0 0.0
    %808 = vmatpush1.msra.mxu0 0.0
    %809 = vmatprep.subr.mxu0 0.0
    %810 = vmatpush1.msra.mxu0 0.0
    %811 = vmatprep.subr.mxu0 0.0
    %812 = vmatpush1.msra.mxu0 0.0
    %813 = vmatprep.subr.mxu0 0.0
    %814 = vmatpush1.msra.mxu0 0.0
    %815 = vmatprep.subr.mxu0 0.0
    %816 = vmatpush1.msra.mxu0 0.0
    %817 = vmatprep.subr.mxu0 0.0
    %818 = vmatpush1.msra.mxu0 0.0
    %819 = vmatprep.subr.mxu0 0.0
    %820 = vmatpush1.msra.mxu0 0.0
    %821 = vmatprep.subr.mxu0 0.0
    %822 = vmatpush1.msra.mxu0 0.0
    %823 = vmatprep.subr.mxu0 0.0
    %824 = vmatpush1.msra.mxu0 0.0
    %825 = vmatprep.mubr.f32.mxu0 0.0
    %826 = vmatmul.mubr.f32.gmra.mrb[0].mxu0 %v758
    %v827 = vpop.f32.mrb[0].mxu0
    %v828 = vadd.f32 0.0, %v827
    %v829 = vpop.f32.mrb[0].mxu0
    %830 = vdwg.mxu0
    %v831 = vadd.f32 %v760, %v828
    %v832 = vtanh.pop %v831
    %833 = vst [vmem:[#allocation11] sm:$0xff] %v832
    %v834 = vld [vmem:[#allocation9] sm:$0xff]
    %v835 = vld [vmem:[#allocation9 + $0x8] sm:$0xff]
    %v836 = vld [vmem:[#allocation9 + $0x10] sm:$0xff]
    %v837 = vld [vmem:[#allocation9 + $0x18] sm:$0xff]
    %v838 = vld [vmem:[#allocation9 + $0x20] sm:$0xff]
    %v839 = vld [vmem:[#allocation9 + $0x28] sm:$0xff]
    %v840 = vld [vmem:[#allocation9 + $0x30] sm:$0xff]
    %v841 = vld [vmem:[#allocation9 + $0x38] sm:$0xff]
    %v842 = vld [vmem:[#allocation9 + $0x40] sm:$0xff]
    %v843 = vld [vmem:[#allocation9 + $0x48] sm:$0xff]
    %v844 = vld [vmem:[#allocation9 + $0x50] sm:$0xff]
    %v845 = vld [vmem:[#allocation9 + $0x58] sm:$0xff]
    %v846 = vld [vmem:[#allocation9 + $0x60] sm:$0xff]
    %v847 = vld [vmem:[#allocation9 + $0x68] sm:$0xff]
    %v848 = vld [vmem:[#allocation9 + $0x70] sm:$0xff]
    %v849 = vld [vmem:[#allocation9 + $0x78] sm:$0xff]
    %v850 = vld [vmem:[%s5] sm:$0x1]
    %v852 = vlaneseq
    %v853 = vshrl.u32 %v852, 7
    %v854 = vsub.s32 0, %v853
    %v855 = vrot.slane %v850, %v854
    %857 = vmatprep.subr.mxu0 0.0
    %858 = vmatpush1.msra.mxu0 %v834
    %859 = vmatprep.subr.mxu0 0.0
    %860 = vmatpush1.msra.mxu0 %v835
    %861 = vmatprep.subr.mxu0 0.0
    %862 = vmatpush1.msra.mxu0 %v836
    %863 = vmatprep.subr.mxu0 0.0
    %864 = vmatpush1.msra.mxu0 %v837
    %865 = vmatprep.subr.mxu0 0.0
    %866 = vmatpush1.msra.mxu0 %v838
    %867 = vmatprep.subr.mxu0 0.0
    %868 = vmatpush1.msra.mxu0 %v839
    %869 = vmatprep.subr.mxu0 0.0
    %870 = vmatpush1.msra.mxu0 %v840
    %871 = vmatprep.subr.mxu0 0.0
    %872 = vmatpush1.msra.mxu0 %v841
    %873 = vmatprep.subr.mxu0 0.0
    %874 = vmatpush1.msra.mxu0 %v842
    %875 = vmatprep.subr.mxu0 0.0
    %876 = vmatpush1.msra.mxu0 %v843
    %877 = vmatprep.subr.mxu0 0.0
    %878 = vmatpush1.msra.mxu0 %v844
    %879 = vmatprep.subr.mxu0 0.0
    %880 = vmatpush1.msra.mxu0 %v845
    %881 = vmatprep.subr.mxu0 0.0
    %882 = vmatpush1.msra.mxu0 %v846
    %883 = vmatprep.subr.mxu0 0.0
    %884 = vmatpush1.msra.mxu0 %v847
    %885 = vmatprep.subr.mxu0 0.0
    %886 = vmatpush1.msra.mxu0 %v848
    %887 = vmatprep.subr.mxu0 0.0
    %888 = vmatpush1.msra.mxu0 %v849
    %889 = vmatprep.subr.mxu0 0.0
    %890 = vmatpush1.msra.mxu0 0.0
    %891 = vmatprep.subr.mxu0 0.0
    %892 = vmatpush1.msra.mxu0 0.0
    %893 = vmatprep.subr.mxu0 0.0
    %894 = vmatpush1.msra.mxu0 0.0
    %895 = vmatprep.subr.mxu0 0.0
    %896 = vmatpush1.msra.mxu0 0.0
    %897 = vmatprep.subr.mxu0 0.0
    %898 = vmatpush1.msra.mxu0 0.0
    %899 = vmatprep.subr.mxu0 0.0
    %900 = vmatpush1.msra.mxu0 0.0
    %901 = vmatprep.subr.mxu0 0.0
    %902 = vmatpush1.msra.mxu0 0.0
    %903 = vmatprep.subr.mxu0 0.0
    %904 = vmatpush1.msra.mxu0 0.0
    %905 = vmatprep.subr.mxu0 0.0
    %906 = vmatpush1.msra.mxu0 0.0
    %907 = vmatprep.subr.mxu0 0.0
    %908 = vmatpush1.msra.mxu0 0.0
    %909 = vmatprep.subr.mxu0 0.0
    %910 = vmatpush1.msra.mxu0 0.0
    %911 = vmatprep.subr.mxu0 0.0
    %912 = vmatpush1.msra.mxu0 0.0
    %913 = vmatprep.subr.mxu0 0.0
    %914 = vmatpush1.msra.mxu0 0.0
    %915 = vmatprep.subr.mxu0 0.0
    %916 = vmatpush1.msra.mxu0 0.0
    %917 = vmatprep.subr.mxu0 0.0
    %918 = vmatpush1.msra.mxu0 0.0
    %919 = vmatprep.subr.mxu0 0.0
    %920 = vmatpush1.msra.mxu0 0.0
    %921 = vmatprep.mubr.f32.mxu0 0.0
    %922 = vmatmul.mubr.f32.gmra.mrb[0].mxu0 %v832
    %v923 = vpop.f32.mrb[0].mxu0
    %v924 = vadd.f32 %v855, %v923
    %v925 = vpop.f32.mrb[0].mxu0
    %926 = vdwg.mxu0
    %927 = vst [vmem:[#allocation12] sm:$0xff] %v924
    // Predicated region
    $region42: #{tpu_custom_call.1} parent=1 // pred_check
      _
    $region43: #{tpu_custom_call.1} parent=1 // pred_check_branch
      %929 = sbr.rel (0) target = $region45
    $region44: #{tpu_custom_call.1} parent=1 // pred_region
      %s931 = ssub.s32 128, 128
      %932 = vsyncadd [#allocation5], %s931
      %s934 = sshll.u32 [#allocation11], 4
      %s935 = int_to_ptr.vmem [resolvable:$true] %s934
      %937 = dma.vmem_to_hbm [thread:$0]  %s935, 128, %s6, [#allocation5]
    $region45: #{tpu_custom_call.1} parent=1 // pred_fallthru
      _
    // Predicated region
    $region46: #{tpu_custom_call.1} parent=1 // pred_check
      _
    $region47: #{tpu_custom_call.1} parent=1 // pred_check_branch
      %939 = sbr.rel (0) target = $region49
    $region48: #{tpu_custom_call.1} parent=1 // pred_region
      %s941 = ssub.s32 128, 128
      %942 = vsyncadd [#allocation13], %s941
      %s944 = sshll.u32 [#allocation12], 4
      %s945 = int_to_ptr.vmem [resolvable:$true] %s944
      %947 = dma.vmem_to_hbm [thread:$0]  %s945, 128, %s7, [#allocation13]
    $region49: #{tpu_custom_call.1} parent=1 // pred_fallthru
      _
    // Predicated region
    $region50: #{tpu_custom_call.1} parent=1 // pred_check
      _
    $region51: #{tpu_custom_call.1} parent=1 // pred_check_branch
      %949 = sbr.rel (0) target = $region53
    $region52: #{tpu_custom_call.1} parent=1 // pred_region
      %950 = dma.done [#allocation5], 128
    $region53: #{tpu_custom_call.1} parent=1 // pred_fallthru
      _
    // Predicated region
    $region54: #{tpu_custom_call.1} parent=1 // pred_check
      _
    $region55: #{tpu_custom_call.1} parent=1 // pred_check_branch
      %952 = sbr.rel (0) target = $region57
    $region56: #{tpu_custom_call.1} parent=1 // pred_region
      %953 = dma.done [#allocation13], 128
    $region57: #{tpu_custom_call.1} parent=1 // pred_fallthru
      _
    %954 = vsyncpa [#allocation4], 1
    %955 = vsyncpa [#allocation7], 1
    %956 = vsyncpa [#allocation10], 1
    %957 = vsyncpa [#allocation5], 1
    %958 = vsyncpa [#allocation13], 1

</llo_original>
